<compile_context>
chip_gen: v5e
topology: v5e:2x2
jax: 0.10.0
libtpu: 0.0.40
codegen_flags: <defaults>
</compile_context>

<pallas_src>
import jax
import jax.numpy as jnp
from jax.experimental import pallas as pl
from jax.experimental.pallas import tpu as pltpu

BN_EPS = 1e-5
LANE = 128


def _residual_block_kernel(x_ref, w1_ref, g1_ref, be1_ref,
                           w2_ref, g2_ref, be2_ref, o_ref):
    x = x_ref[...].astype(jnp.float32)
    inv_n = jnp.float32(1.0 / x.shape[0])

    # Contract x's feature dim with the weight's "in" dim (PyTorch layout (out, in)),
    # i.e. x @ W^T, without any wrapper-side transpose.
    dims = (((1,), (1,)), ((), ()))

    # ---- fc1 (bias cancelled by BN mean subtraction) + bn1 ------------------
    h = jax.lax.dot_general(x, w1_ref[...], dims, preferred_element_type=jnp.float32)
    s = jnp.sum(h, axis=0, keepdims=True)
    ss = jnp.sum(h * h, axis=0, keepdims=True)
    mean = s * inv_n
    var = ss * inv_n - mean * mean
    scale = g1_ref[...] * jax.lax.rsqrt(var + BN_EPS)
    shift = be1_ref[...] - mean * scale
    h = h * scale + shift

    # ---- ReLU ---------------------------------------------------------------
    h = jnp.maximum(h, 0.0)

    # ---- fc2 + bn2 ----------------------------------------------------------
    h = jax.lax.dot_general(h, w2_ref[...], dims, preferred_element_type=jnp.float32)
    s = jnp.sum(h, axis=0, keepdims=True)
    ss = jnp.sum(h * h, axis=0, keepdims=True)
    mean = s * inv_n
    var = ss * inv_n - mean * mean
    scale = g2_ref[...] * jax.lax.rsqrt(var + BN_EPS)
    shift = be2_ref[...] - mean * scale
    h = h * scale + shift

    # ---- residual add -------------------------------------------------------
    o_ref[...] = (x + h).astype(o_ref.dtype)


@jax.jit
def simple_residual_block(x, w1, b1, g1, be1, w2, b2, g2, be2):
    """x: (N, D) float32. w1/w2: PyTorch layout (out, in). b1/b2 are accepted for API
    parity with the module but are mathematically cancelled by training-mode BN and
    therefore never passed to the kernel."""
    del b1, b2  # cancelled exactly by the BatchNorm mean subtraction
    n, d = x.shape

    # Lane-dense padding of the feature dim to a multiple of 128.
    dp = ((d + LANE - 1) // LANE) * LANE
    pad = dp - d
    if pad:
        x_p = jnp.pad(x, ((0, 0), (0, pad)))
        w1_p = jnp.pad(w1, ((0, pad), (0, pad)))
        w2_p = jnp.pad(w2, ((0, pad), (0, pad)))
        g1_p, be1_p = jnp.pad(g1, (0, pad)), jnp.pad(be1, (0, pad))
        g2_p, be2_p = jnp.pad(g2, (0, pad)), jnp.pad(be2, (0, pad))
    else:
        x_p, w1_p, w2_p = x, w1, w2
        g1_p, be1_p, g2_p, be2_p = g1, be1, g2, be2

    # Keep 1-D BN params as lane-dense (1, Dp) tiles in VMEM.
    g1r, be1r = g1_p.reshape(1, dp), be1_p.reshape(1, dp)
    g2r, be2r = g2_p.reshape(1, dp), be2_p.reshape(1, dp)

    vmem = pl.BlockSpec(memory_space=pltpu.MemorySpace.VMEM)
    out_p = pl.pallas_call(
        _residual_block_kernel,
        out_shape=jax.ShapeDtypeStruct((n, dp), x.dtype),
        in_specs=[vmem] * 7,
        out_specs=vmem,
        compiler_params=pltpu.CompilerParams(vmem_limit_bytes=32 * 1024 * 1024),
    )(x_p, w1_p, g1r, be1r, w2_p, g2r, be2r)

    return out_p[:, :d] if pad else out_p


def _init_params(key, data_dim):
    """PyTorch-like defaults: Linear U(+-1/sqrt(fan_in)); BatchNorm gamma=1, beta=0."""
    ks = jax.random.split(key, 4)
    bound = 1.0 / jnp.sqrt(jnp.float32(data_dim))
    w1 = jax.random.uniform(ks[0], (data_dim, data_dim), jnp.float32, -bound, bound)
    b1 = jax.random.uniform(ks[1], (data_dim,), jnp.float32, -bound, bound)
    w2 = jax.random.uniform(ks[2], (data_dim, data_dim), jnp.float32, -bound, bound)
    b2 = jax.random.uniform(ks[3], (data_dim,), jnp.float32, -bound, bound)
    g1 = jnp.ones((data_dim,), jnp.float32)
    be1 = jnp.zeros((data_dim,), jnp.float32)
    g2 = jnp.ones((data_dim,), jnp.float32)
    be2 = jnp.zeros((data_dim,), jnp.float32)
    return w1, b1, g1, be1, w2, b2, g2, be2


def _reference(x, w1, b1, g1, be1, w2, b2, g2, be2):
    """Pure-JAX reference of the PyTorch forward (training-mode BN, biases included)."""
    def bn(h, g, be):
        m = jnp.mean(h, axis=0, keepdims=True)
        v = jnp.mean((h - m) ** 2, axis=0, keepdims=True)
        return (h - m) / jnp.sqrt(v + BN_EPS) * g + be

    res = x @ w1.T + b1
    res = bn(res, g1, be1)
    res = jnp.maximum(res, 0.0)
    res = res @ w2.T + b2
    res = bn(res, g2, be2)
    return x + res


if __name__ == "__main__":
    batch, data_dim = 8, 32
    key = jax.random.PRNGKey(0)
    kx, kp = jax.random.split(key)
    x = jax.random.normal(kx, (batch, data_dim), jnp.float32)
    params = _init_params(kp, data_dim)

    out = simple_residual_block(x, *params)
    out = jax.block_until_ready(out)

    ref = _reference(x, *params)
    assert out.shape == (batch, data_dim)
    assert jnp.allclose(out, ref, atol=1e-4, rtol=1e-4), "mismatch vs reference"

    print("KERNEL_OK")
</pallas_src>

<mosaic_0001>
module attributes {stable_mosaic.version = 11 : i64} {
  func.func @_residual_block_kernel(%arg0: memref<8x128xf32, #tpu.memory_space<vmem>>, %arg1: memref<128x128xf32, #tpu.memory_space<vmem>>, %arg2: memref<1x128xf32, #tpu.memory_space<vmem>>, %arg3: memref<1x128xf32, #tpu.memory_space<vmem>>, %arg4: memref<128x128xf32, #tpu.memory_space<vmem>>, %arg5: memref<1x128xf32, #tpu.memory_space<vmem>>, %arg6: memref<1x128xf32, #tpu.memory_space<vmem>>, %arg7: memref<8x128xf32, #tpu.memory_space<vmem>>) attributes {dimension_semantics = [], scalar_prefetch = 0 : i64, scratch_operands = 0 : i64, tpu.core_type = #tpu.core_type<tc>} {
    %c0 = arith.constant 0 : index
    %c0_0 = arith.constant 0 : index
    %0 = vector.load %arg0[%c0, %c0_0] : memref<8x128xf32, #tpu.memory_space<vmem>>, vector<8x128xf32>
    %c0_1 = arith.constant 0 : index
    %c0_2 = arith.constant 0 : index
    %1 = vector.load %arg1[%c0_1, %c0_2] : memref<128x128xf32, #tpu.memory_space<vmem>>, vector<128x128xf32>
    %cst = arith.constant dense<0.000000e+00> : vector<8x128xf32>
    %2 = tpu.matmul %0, %1, %cst {dimension_numbers = #tpu.dot_dimension_numbers<[1], [1], [0], [0], [0, 0, 1, 0], [], []>} : vector<8x128xf32>, vector<128x128xf32>, vector<8x128xf32> -> vector<8x128xf32>
    %cst_3 = arith.constant dense<0.000000e+00> : vector<128xf32>
    %3 = vector.multi_reduction <add>, %2, %cst_3 [0] : vector<8x128xf32> to vector<128xf32>
    %4 = vector.shape_cast %3 : vector<128xf32> to vector<1x128xf32>
    %5 = arith.mulf %2, %2 : vector<8x128xf32>
    %cst_4 = arith.constant dense<0.000000e+00> : vector<128xf32>
    %6 = vector.multi_reduction <add>, %5, %cst_4 [0] : vector<8x128xf32> to vector<128xf32>
    %7 = vector.shape_cast %6 : vector<128xf32> to vector<1x128xf32>
    %cst_5 = arith.constant 1.250000e-01 : f32
    %8 = vector.broadcast %cst_5 : f32 to vector<1x128xf32>
    %9 = arith.mulf %4, %8 : vector<1x128xf32>
    %cst_6 = arith.constant 1.250000e-01 : f32
    %10 = vector.broadcast %cst_6 : f32 to vector<1x128xf32>
    %11 = arith.mulf %7, %10 : vector<1x128xf32>
    %12 = arith.mulf %9, %9 : vector<1x128xf32>
    %13 = arith.subf %11, %12 : vector<1x128xf32>
    %c0_7 = arith.constant 0 : index
    %c0_8 = arith.constant 0 : index
    %14 = vector.load %arg2[%c0_7, %c0_8] : memref<1x128xf32, #tpu.memory_space<vmem>>, vector<1x128xf32>
    %cst_9 = arith.constant 9.99999974E-6 : f32
    %15 = vector.broadcast %cst_9 : f32 to vector<1x128xf32>
    %16 = arith.addf %13, %15 : vector<1x128xf32>
    %17 = math.rsqrt %16 : vector<1x128xf32>
    %18 = arith.mulf %14, %17 : vector<1x128xf32>
    %c0_10 = arith.constant 0 : index
    %c0_11 = arith.constant 0 : index
    %19 = vector.load %arg3[%c0_10, %c0_11] : memref<1x128xf32, #tpu.memory_space<vmem>>, vector<1x128xf32>
    %20 = arith.mulf %9, %18 : vector<1x128xf32>
    %21 = arith.subf %19, %20 : vector<1x128xf32>
    %22 = vector.broadcast %18 : vector<1x128xf32> to vector<8x128xf32>
    %23 = arith.mulf %2, %22 : vector<8x128xf32>
    %24 = vector.broadcast %21 : vector<1x128xf32> to vector<8x128xf32>
    %25 = arith.addf %23, %24 : vector<8x128xf32>
    %cst_12 = arith.constant 0.000000e+00 : f32
    %26 = vector.broadcast %cst_12 : f32 to vector<8x128xf32>
    %27 = arith.maximumf %25, %26 : vector<8x128xf32>
    %c0_13 = arith.constant 0 : index
    %c0_14 = arith.constant 0 : index
    %28 = vector.load %arg4[%c0_13, %c0_14] : memref<128x128xf32, #tpu.memory_space<vmem>>, vector<128x128xf32>
    %cst_15 = arith.constant dense<0.000000e+00> : vector<8x128xf32>
    %29 = tpu.matmul %27, %28, %cst_15 {dimension_numbers = #tpu.dot_dimension_numbers<[1], [1], [0], [0], [0, 0, 1, 0], [], []>} : vector<8x128xf32>, vector<128x128xf32>, vector<8x128xf32> -> vector<8x128xf32>
    %cst_16 = arith.constant dense<0.000000e+00> : vector<128xf32>
    %30 = vector.multi_reduction <add>, %29, %cst_16 [0] : vector<8x128xf32> to vector<128xf32>
    %31 = vector.shape_cast %30 : vector<128xf32> to vector<1x128xf32>
    %32 = arith.mulf %29, %29 : vector<8x128xf32>
    %cst_17 = arith.constant dense<0.000000e+00> : vector<128xf32>
    %33 = vector.multi_reduction <add>, %32, %cst_17 [0] : vector<8x128xf32> to vector<128xf32>
    %34 = vector.shape_cast %33 : vector<128xf32> to vector<1x128xf32>
    %cst_18 = arith.constant 1.250000e-01 : f32
    %35 = vector.broadcast %cst_18 : f32 to vector<1x128xf32>
    %36 = arith.mulf %31, %35 : vector<1x128xf32>
    %cst_19 = arith.constant 1.250000e-01 : f32
    %37 = vector.broadcast %cst_19 : f32 to vector<1x128xf32>
    %38 = arith.mulf %34, %37 : vector<1x128xf32>
    %39 = arith.mulf %36, %36 : vector<1x128xf32>
    %40 = arith.subf %38, %39 : vector<1x128xf32>
    %c0_20 = arith.constant 0 : index
    %c0_21 = arith.constant 0 : index
    %41 = vector.load %arg5[%c0_20, %c0_21] : memref<1x128xf32, #tpu.memory_space<vmem>>, vector<1x128xf32>
    %cst_22 = arith.constant 9.99999974E-6 : f32
    %42 = vector.broadcast %cst_22 : f32 to vector<1x128xf32>
    %43 = arith.addf %40, %42 : vector<1x128xf32>
    %44 = math.rsqrt %43 : vector<1x128xf32>
    %45 = arith.mulf %41, %44 : vector<1x128xf32>
    %c0_23 = arith.constant 0 : index
    %c0_24 = arith.constant 0 : index
    %46 = vector.load %arg6[%c0_23, %c0_24] : memref<1x128xf32, #tpu.memory_space<vmem>>, vector<1x128xf32>
    %47 = arith.mulf %36, %45 : vector<1x128xf32>
    %48 = arith.subf %46, %47 : vector<1x128xf32>
    %49 = vector.broadcast %45 : vector<1x128xf32> to vector<8x128xf32>
    %50 = arith.mulf %29, %49 : vector<8x128xf32>
    %51 = vector.broadcast %48 : vector<1x128xf32> to vector<8x128xf32>
    %52 = arith.addf %50, %51 : vector<8x128xf32>
    %53 = arith.addf %0, %52 : vector<8x128xf32>
    %c0_25 = arith.constant 0 : index
    %c0_26 = arith.constant 0 : index
    %54 = vector.load %arg7[%c0_25, %c0_26] : memref<8x128xf32, #tpu.memory_space<vmem>>, vector<8x128xf32>
    tpu.vector_store %arg7[%c0_25, %c0_26], %53 {strides = array<i32>} : memref<8x128xf32, #tpu.memory_space<vmem>>, vector<8x128xf32>,
    return
  }
}

</mosaic_0001>

<llo_original>
// kernel: simple_residual_block.1
$region0: #{simple_residual_block.1}
  #allocation0 [shape = 'u32[]', space=smem, size = 0x4, offset = 0x4, fixed_abs, tag = 'smem constant byte address 0x4 - core index']
  #allocation1 [shape = 'u32[72,128]{1,0:T(1,128)}', space=vmem, size = 0x9000, scoped, tag = 'internal scratch']
  %s0 = inlined_call_operand.vmem [shape: f32[8,128], index: 0, kind: input, shape index: {}]
  %s1 = inlined_call_operand.vmem [shape: f32[128,128], index: 1, kind: input, shape index: {}]
  %s2 = inlined_call_operand.vmem [shape: f32[1,128], index: 2, kind: input, shape index: {}]
  %s3 = inlined_call_operand.vmem [shape: f32[1,128], index: 3, kind: input, shape index: {}]
  %s4 = inlined_call_operand.vmem [shape: f32[128,128], index: 4, kind: input, shape index: {}]
  %s5 = inlined_call_operand.vmem [shape: f32[1,128], index: 5, kind: input, shape index: {}]
  %s6 = inlined_call_operand.vmem [shape: f32[1,128], index: 6, kind: input, shape index: {}]
  %s7 = inlined_call_operand.hbm [shape: f32[8,128], index: 7, kind: output, shape index: {}]
  %s8 = sld [smem:[#allocation0]]
  $region38: #{simple_residual_block.1} parent=0
    _
  %s10 = ssub.s32 1, %s8
  %s11 = scalar_select 0, %s10, %s8
  $region1: #{simple_residual_block.1} parent=0
    #allocation2 [shape = 'u8[4096]{0}', space=vmem, size = 0x1000, scoped, tag = 'output window, operand 0, single buffered']
    #allocation3 [shape = 's32[1]{0}', space=sflag, size = 0x4, scoped, tag = 'scoped memory for simple_residual_block.1']
    %12 = vsyncpa [#allocation3], 0
    // Predicated region
    $region2: #{simple_residual_block.1} parent=1 // pred_check
      _
    $region3: #{simple_residual_block.1} parent=1 // pred_check_branch
      %14 = sbr.rel (0) target = $region5
    $region4: #{simple_residual_block.1} parent=1 // pred_region
      _
    $region5: #{simple_residual_block.1} parent=1 // pred_fallthru
      _
    // Predicated region
    $region6: #{simple_residual_block.1} parent=1 // pred_check
      _
    $region7: #{simple_residual_block.1} parent=1 // pred_check_branch
      %16 = sbr.rel (0) target = $region9
    $region8: #{simple_residual_block.1} parent=1 // pred_region
      _
    $region9: #{simple_residual_block.1} parent=1 // pred_fallthru
      _
    // Predicated region
    $region10: #{simple_residual_block.1} parent=1 // pred_check
      _
    $region11: #{simple_residual_block.1} parent=1 // pred_check_branch
      %18 = sbr.rel (0) target = $region13
    $region12: #{simple_residual_block.1} parent=1 // pred_region
      _
    $region13: #{simple_residual_block.1} parent=1 // pred_fallthru
      _
    // Predicated region
    $region14: #{simple_residual_block.1} parent=1 // pred_check
      _
    $region15: #{simple_residual_block.1} parent=1 // pred_check_branch
      %20 = sbr.rel (0) target = $region17
    $region16: #{simple_residual_block.1} parent=1 // pred_region
      _
    $region17: #{simple_residual_block.1} parent=1 // pred_fallthru
      _
    // Predicated region
    $region18: #{simple_residual_block.1} parent=1 // pred_check
      _
    $region19: #{simple_residual_block.1} parent=1 // pred_check_branch
      %22 = sbr.rel (0) target = $region21
    $region20: #{simple_residual_block.1} parent=1 // pred_region
      _
    $region21: #{simple_residual_block.1} parent=1 // pred_fallthru
      _
    // Predicated region
    $region22: #{simple_residual_block.1} parent=1 // pred_check
      _
    $region23: #{simple_residual_block.1} parent=1 // pred_check_branch
      %24 = sbr.rel (0) target = $region25
    $region24: #{simple_residual_block.1} parent=1 // pred_region
      _
    $region25: #{simple_residual_block.1} parent=1 // pred_fallthru
      _
    // Predicated region
    $region26: #{simple_residual_block.1} parent=1 // pred_check
      _
    $region27: #{simple_residual_block.1} parent=1 // pred_check_branch
      %26 = sbr.rel (0) target = $region29
    $region28: #{simple_residual_block.1} parent=1 // pred_region
      _
    $region29: #{simple_residual_block.1} parent=1 // pred_fallthru
      _
    %v27 = vld [vmem:[%s0] sm:$0xff]
    %v28 = vld [vmem:[%s1] sm:$0xff]
    %v29 = vld [vmem:[%s1 + $0x8] sm:$0xff]
    %v30 = vld [vmem:[%s1 + $0x10] sm:$0xff]
    %v31 = vld [vmem:[%s1 + $0x18] sm:$0xff]
    %v32 = vld [vmem:[%s1 + $0x20] sm:$0xff]
    %v33 = vld [vmem:[%s1 + $0x28] sm:$0xff]
    %v34 = vld [vmem:[%s1 + $0x30] sm:$0xff]
    %v35 = vld [vmem:[%s1 + $0x38] sm:$0xff]
    %v36 = vld [vmem:[%s1 + $0x40] sm:$0xff]
    %v37 = vld [vmem:[%s1 + $0x48] sm:$0xff]
    %v38 = vld [vmem:[%s1 + $0x50] sm:$0xff]
    %v39 = vld [vmem:[%s1 + $0x58] sm:$0xff]
    %v40 = vld [vmem:[%s1 + $0x60] sm:$0xff]
    %v41 = vld [vmem:[%s1 + $0x68] sm:$0xff]
    %v42 = vld [vmem:[%s1 + $0x70] sm:$0xff]
    %v43 = vld [vmem:[%s1 + $0x78] sm:$0xff]
    %44 = vmatpush.xpose.msra.mxu0 %v43
    %45 = vmatpush.xpose.msra.mxu0 %v42
    %46 = vmatpush.xpose.msra.mxu0 %v41
    %47 = vmatpush.xpose.msra.mxu0 %v40
    %48 = vmatpush.xpose.msra.mxu0 %v39
    %49 = vmatpush.xpose.msra.mxu0 %v38
    %50 = vmatpush.xpose.msra.mxu0 %v37
    %51 = vmatpush.xpose.msra.mxu0 %v36
    %52 = vmatpush.xpose.msra.mxu0 %v35
    %53 = vmatpush.xpose.msra.mxu0 %v34
    %54 = vmatpush.xpose.msra.mxu0 %v33
    %55 = vmatpush.xpose.msra.mxu0 %v32
    %56 = vmatpush.xpose.msra.mxu0 %v31
    %57 = vmatpush.xpose.msra.mxu0 %v30
    %58 = vmatpush.xpose.msra.mxu0 %v29
    %59 = vmatpush.xpose.msra.mxu0 %v28
    %60 = vmatmul.f32.gmra.mxu0 %v27
    %v61 = vpop.f32.mrf.mxu0
    %v62 = vadd.f32 0.0, %v61
    %63 = vdwg.mxu0
    %v64 = vrot.slane %v62, 4
    %v65 = vadd.f32 %v62, %v64
    %v66 = vrot.slane %v65, 2
    %v67 = vadd.f32 %v65, %v66
    %v68 = vrot.slane %v67, 1
    %v69 = vadd.f32 %v67, %v68
    %v70 = vmul.f32 %v62, %v62
    %v71 = vrot.slane %v70, 4
    %v72 = vadd.f32 %v70, %v71
    %v73 = vrot.slane %v72, 2
    %v74 = vadd.f32 %v72, %v73
    %v75 = vrot.slane %v74, 1
    %v76 = vadd.f32 %v74, %v75
    %v77 = vmul.f32 %v69, 0.125
    %v78 = vmul.f32 %v76, 0.125
    %v79 = vmul.f32 %v77, %v77
    %v80 = vsub.f32 %v78, %v79
    %v81 = vld [vmem:[%s2] sm:$0x1]
    %v82 = vadd.f32 %v80, 1e-05
    %v83 = vrsqrt.pop %v82
    %v84 = vmul.f32 %v83, %v82
    %v85 = vmul.f32 %v84, %v83
    %v86 = vmul.f32 0.5, %v85
    %v87 = vsub.f32 1.5, %v86
    %v88 = vmul.f32 %v83, %v87
    %vm89 = vweird.f32 %v82
    %vm90 = vweird.f32 %v83
    %vm91 = vmor %vm89, %vm90
    %v92 = vsel %vm91, %v83, %v88
    %v93 = vmul.f32 %v81, %v92
    %v94 = vld [vmem:[%s3] sm:$0x1]
    %v95 = vmul.f32 %v77, %v93
    %v96 = vsub.f32 %v94, %v95
    %v98 = vperm.slane %v93, 0
    %v100 = vmul.f32 %v62, %v98
    %v102 = vperm.slane %v96, 0
    %v104 = vadd.f32 %v100, %v102
    %v105 = vmax.f32 %v104, 0.0
    %v106 = vld [vmem:[%s4] sm:$0xff]
    %v107 = vld [vmem:[%s4 + $0x8] sm:$0xff]
    %v108 = vld [vmem:[%s4 + $0x10] sm:$0xff]
    %v109 = vld [vmem:[%s4 + $0x18] sm:$0xff]
    %v110 = vld [vmem:[%s4 + $0x20] sm:$0xff]
    %v111 = vld [vmem:[%s4 + $0x28] sm:$0xff]
    %v112 = vld [vmem:[%s4 + $0x30] sm:$0xff]
    %v113 = vld [vmem:[%s4 + $0x38] sm:$0xff]
    %v114 = vld [vmem:[%s4 + $0x40] sm:$0xff]
    %v115 = vld [vmem:[%s4 + $0x48] sm:$0xff]
    %v116 = vld [vmem:[%s4 + $0x50] sm:$0xff]
    %v117 = vld [vmem:[%s4 + $0x58] sm:$0xff]
    %v118 = vld [vmem:[%s4 + $0x60] sm:$0xff]
    %v119 = vld [vmem:[%s4 + $0x68] sm:$0xff]
    %v120 = vld [vmem:[%s4 + $0x70] sm:$0xff]
    %v121 = vld [vmem:[%s4 + $0x78] sm:$0xff]
    %122 = vmatpush.xpose.msra.mxu0 %v121
    %123 = vmatpush.xpose.msra.mxu0 %v120
    %124 = vmatpush.xpose.msra.mxu0 %v119
    %125 = vmatpush.xpose.msra.mxu0 %v118
    %126 = vmatpush.xpose.msra.mxu0 %v117
    %127 = vmatpush.xpose.msra.mxu0 %v116
    %128 = vmatpush.xpose.msra.mxu0 %v115
    %129 = vmatpush.xpose.msra.mxu0 %v114
    %130 = vmatpush.xpose.msra.mxu0 %v113
    %131 = vmatpush.xpose.msra.mxu0 %v112
    %132 = vmatpush.xpose.msra.mxu0 %v111
    %133 = vmatpush.xpose.msra.mxu0 %v110
    %134 = vmatpush.xpose.msra.mxu0 %v109
    %135 = vmatpush.xpose.msra.mxu0 %v108
    %136 = vmatpush.xpose.msra.mxu0 %v107
    %137 = vmatpush.xpose.msra.mxu0 %v106
    %138 = vmatmul.f32.gmra.mxu0 %v105
    %v139 = vpop.f32.mrf.mxu0
    %v140 = vadd.f32 0.0, %v139
    %141 = vdwg.mxu0
    %v142 = vrot.slane %v140, 4
    %v143 = vadd.f32 %v140, %v142
    %v144 = vrot.slane %v143, 2
    %v145 = vadd.f32 %v143, %v144
    %v146 = vrot.slane %v145, 1
    %v147 = vadd.f32 %v145, %v146
    %v148 = vmul.f32 %v140, %v140
    %v149 = vrot.slane %v148, 4
    %v150 = vadd.f32 %v148, %v149
    %v151 = vrot.slane %v150, 2
    %v152 = vadd.f32 %v150, %v151
    %v153 = vrot.slane %v152, 1
    %v154 = vadd.f32 %v152, %v153
    %v155 = vmul.f32 %v147, 0.125
    %v156 = vmul.f32 %v154, 0.125
    %v157 = vmul.f32 %v155, %v155
    %v158 = vsub.f32 %v156, %v157
    %v159 = vld [vmem:[%s5] sm:$0x1]
    %v160 = vadd.f32 %v158, 1e-05
    %v161 = vrsqrt.pop %v160
    %v162 = vmul.f32 %v161, %v160
    %v163 = vmul.f32 %v162, %v161
    %v164 = vmul.f32 0.5, %v163
    %v165 = vsub.f32 1.5, %v164
    %v166 = vmul.f32 %v161, %v165
    %vm167 = vweird.f32 %v160
    %vm168 = vweird.f32 %v161
    %vm169 = vmor %vm167, %vm168
    %v170 = vsel %vm169, %v161, %v166
    %v171 = vmul.f32 %v159, %v170
    %v172 = vld [vmem:[%s6] sm:$0x1]
    %v173 = vmul.f32 %v155, %v171
    %v174 = vsub.f32 %v172, %v173
    %v176 = vperm.slane %v171, 0
    %v178 = vmul.f32 %v140, %v176
    %v180 = vperm.slane %v174, 0
    %v182 = vadd.f32 %v178, %v180
    %v183 = vadd.f32 %v27, %v182
    %184 = vst [vmem:[#allocation2] sm:$0xff] %v183
    // Predicated region
    $region30: #{simple_residual_block.1} parent=1 // pred_check
      _
    $region31: #{simple_residual_block.1} parent=1 // pred_check_branch
      %186 = sbr.rel (0) target = $region33
    $region32: #{simple_residual_block.1} parent=1 // pred_region
      %188 = vsyncadd [#allocation3], 0
      %s190 = sshll.u32 [#allocation2], 4
      %s191 = int_to_ptr.vmem [resolvable:$true] %s190
      %s192 = sshll.u32 %s7, 4
      %s193 = int_to_ptr.hbm [resolvable:$true] %s192
      %195 = dma.vmem_to_hbm [thread:$0]  %s191, 128, %s193, [#allocation3]
    $region33: #{simple_residual_block.1} parent=1 // pred_fallthru
      _
    // Predicated region
    $region34: #{simple_residual_block.1} parent=1 // pred_check
      _
    $region35: #{simple_residual_block.1} parent=1 // pred_check_branch
      %197 = sbr.rel (0) target = $region37
    $region36: #{simple_residual_block.1} parent=1 // pred_region
      %199 = dma.done [#allocation3], 128
    $region37: #{simple_residual_block.1} parent=1 // pred_fallthru
      _
    %200 = vsyncpa [#allocation3], 1

</llo_original>
